<compile_context>
chip_gen: v6e
topology: v6e:2x2x1
jax: 0.10.0
libtpu: 0.0.40
codegen_flags: <defaults>
</compile_context>

<pallas_src>
import functools

import jax
import jax.numpy as jnp
from jax.experimental import pallas as pl
from jax.experimental.pallas import tpu as pltpu


def _bub_kernel(pred_ref, tgt_ref, out_ref,
                pov_acc, pv_acc, ov_acc, v_acc,
                *, gamma, smooth, ignore_index):
    # pred_ref block: (1, C, TS)   logits (f32 or bf16)
    # tgt_ref  block: (1, 1, TS)   i32 labels (ignore_index marks invalid/pad)
    # out_ref  block: (1, C, 1)    f32 per-(batch, class) bub_v2
    # *_acc         : (C, 128) / (1, 128) f32 per-lane partial-sum accumulators
    s = pl.program_id(1)

    @pl.when(s == 0)
    def _():
        pov_acc[...] = jnp.zeros_like(pov_acc)
        pv_acc[...] = jnp.zeros_like(pv_acc)
        ov_acc[...] = jnp.zeros_like(ov_acc)
        v_acc[...] = jnp.zeros_like(v_acc)

    logits = pred_ref[0].astype(jnp.float32)          # (C, TS)
    tgt = tgt_ref[0]                                  # (1, TS) int32
    C, TS = logits.shape

    # softmax over channels == F.softmax(pred, dim=1); the divide is done once
    # on the (1, TS) row with the valid mask folded in, so p * valid == e * inv.
    m = jnp.max(logits, axis=0, keepdims=True)        # (1, TS)
    e = jnp.exp(logits - m)                           # (C, TS)
    denom = jnp.sum(e, axis=0, keepdims=True)         # (1, TS)
    valid_b = tgt != ignore_index                     # (1, TS) bool
    valid_f = valid_b.astype(jnp.float32)             # (1, TS)
    inv = valid_f / denom                             # (1, TS)
    pv = e * inv                                      # (C, TS) = softmax * valid

    # one_hot(clamp(target, 0, C-1)) * valid with a single compare on the slab:
    # invalid pixels get label -1, which never matches a class index.
    tgt_c = jnp.where(valid_b, jnp.clip(tgt, 0, C - 1), -1)   # (1, TS)
    cls_iota = jax.lax.broadcasted_iota(jnp.int32, (C, TS), 0)
    onehot_v = (cls_iota == tgt_c).astype(jnp.float32)        # (C, TS)

    pov = pv * onehot_v                                       # (C, TS)

    # Per-lane partial sums: static 128-aligned chunk adds (pure VPU); the
    # cross-lane (XLU) reduction is deferred to the finalize step.
    def lane_fold(x):
        r = x[:, 0:128]
        for c in range(1, TS // 128):
            r = r + x[:, c * 128:(c + 1) * 128]
        return r

    pov_acc[...] += lane_fold(pov)
    pv_acc[...] += lane_fold(pv)
    ov_acc[...] += lane_fold(onehot_v)
    v_acc[...] += lane_fold(valid_f)

    @pl.when(s == pl.num_programs(1) - 1)
    def _():
        s_pov = jnp.sum(pov_acc[...], axis=1, keepdims=True)  # sum(p*t*v)   (C,1)
        s_pv = jnp.sum(pv_acc[...], axis=1, keepdims=True)    # sum(p*v)     (C,1)
        s_ov = jnp.sum(ov_acc[...], axis=1, keepdims=True)    # sum(t*v)     (C,1)
        s_v = jnp.sum(v_acc[...])                             # sum(v)       scalar

        TP = s_pov + smooth
        FP = s_pv - s_pov
        FN = s_ov - s_pov
        TN = (s_v - s_pv - s_ov + s_pov) + smooth
        tn_sqrt = jnp.sqrt(TP * TN)
        bub = (TP + tn_sqrt) / (TP + FP + FN + tn_sqrt)
        bub_g = jnp.power(bub, gamma)
        bub_g_c = jnp.power(1.0 - bub, gamma)
        bub_v2 = bub_g / jnp.power(bub_g + bub_g_c, 1.0 / gamma)
        out_ref[0] = bub_v2                                   # (C, 1)


def bub_loss_pallas(pred, target, *, gamma=4.0 / 3.0, smooth=1e-10,
                    ignore_index=255, loss_weight=1.0, class_weight=None,
                    tile_spatial=1024, stream_bf16=False):
    """BUBLoss.forward: pred (N,C,H,W) logits, target (N,H,W) int labels."""
    N, C, H, W = pred.shape
    HW = H * W

    # Spatial tile: large enough to amortize the ~0.35us per-grid-step overhead,
    # but never (much) larger than the 128-aligned spatial extent itself.
    hw_al = pl.cdiv(HW, 128) * 128
    tile = max(128, (min(tile_spatial, hw_al) // 128) * 128)
    hw_pad = pl.cdiv(HW, tile) * tile

    in_dtype = jnp.bfloat16 if stream_bf16 else jnp.float32
    pred_flat = pred.reshape(N, C, HW).astype(in_dtype)
    tgt_flat = target.reshape(N, 1, HW).astype(jnp.int32)
    if hw_pad != HW:
        p = hw_pad - HW
        # Padding pixels carry ignore_index -> valid mask zeros them out.
        pred_flat = jnp.pad(pred_flat, ((0, 0), (0, 0), (0, p)))
        tgt_flat = jnp.pad(tgt_flat, ((0, 0), (0, 0), (0, p)),
                           constant_values=ignore_index)

    kernel = functools.partial(_bub_kernel, gamma=gamma, smooth=smooth,
                               ignore_index=ignore_index)

    per_nc = pl.pallas_call(
        kernel,
        out_shape=jax.ShapeDtypeStruct((N, C, 1), jnp.float32),
        grid_spec=pltpu.PrefetchScalarGridSpec(
            num_scalar_prefetch=0,
            grid=(N, hw_pad // tile),
            in_specs=[
                pl.BlockSpec((1, C, tile), lambda n, s: (n, 0, s)),
                pl.BlockSpec((1, 1, tile), lambda n, s: (n, 0, s)),
            ],
            out_specs=pl.BlockSpec((1, C, 1), lambda n, s: (n, 0, 0)),
            scratch_shapes=[
                pltpu.VMEM((C, 128), jnp.float32),   # sum(p * onehot * valid)
                pltpu.VMEM((C, 128), jnp.float32),   # sum(p * valid)
                pltpu.VMEM((C, 128), jnp.float32),   # sum(onehot * valid)
                pltpu.VMEM((1, 128), jnp.float32),   # sum(valid)
            ],
        ),
        compiler_params=pltpu.CompilerParams(
            dimension_semantics=("parallel", "arbitrary")),
    )(pred_flat, tgt_flat)

    per_nc = per_nc[..., 0]                 # (N, C) bub_v2 per sample/class
    per_class = per_nc.mean(axis=0)         # inner @weighted_loss 'mean' over batch
    if class_weight is not None:
        per_class = per_class * jnp.asarray(class_weight, jnp.float32)
    # Classes with index == ignore_index (255) would be skipped; C << 255 here.
    total = jnp.sum(per_class) / C          # sum over classes / num_classes
    # Outer @weighted_loss 'mean' of a scalar is the scalar itself.
    return loss_weight * total


def bub_loss_reference(pred, target, *, gamma=4.0 / 3.0, smooth=1e-10,
                       ignore_index=255, loss_weight=1.0):
    """Pure-JAX reference mirroring the PyTorch module."""
    N, C = pred.shape[0], pred.shape[1]
    p = jax.nn.softmax(pred.astype(jnp.float32), axis=1)
    onehot = jax.nn.one_hot(jnp.clip(target, 0, C - 1), C, dtype=jnp.float32)
    valid = (target != ignore_index).astype(jnp.float32).reshape(N, -1)
    total = 0.0
    for i in range(C):
        pi = p[:, i].reshape(N, -1)
        ti = onehot[..., i].reshape(N, -1)
        TP = jnp.sum(pi * ti * valid, axis=1) + smooth
        TN = jnp.sum((1 - pi) * (1 - ti) * valid, axis=1) + smooth
        FP = jnp.sum(pi * (1 - ti) * valid, axis=1)
        FN = jnp.sum((1 - pi) * ti * valid, axis=1)
        tn_ = jnp.sqrt(TP * TN)
        bub = (TP + tn_) / (TP + FP + FN + tn_)
        bg = bub ** gamma
        bgc = (1 - bub) ** gamma
        bv2 = bg / (bg + bgc) ** (1.0 / gamma)
        total = total + bv2.mean()
    return loss_weight * total / C


if __name__ == "__main__":
    N, C, H, W = 2, 4, 16, 16
    key = jax.random.PRNGKey(0)
    k1, k2, k3 = jax.random.split(key, 3)

    pred = jax.random.normal(k1, (N, C, H, W), dtype=jnp.float32)
    target = jax.random.randint(k2, (N, H, W), 0, C, dtype=jnp.int32)
    # sprinkle some ignore_index pixels to exercise the valid mask
    ignore_pix = jax.random.uniform(k3, (N, H, W)) < 0.1
    target = jnp.where(ignore_pix, jnp.int32(255), target)

    loss = bub_loss_pallas(pred, target)
    loss = jax.block_until_ready(loss)

    ref = jax.block_until_ready(bub_loss_reference(pred, target))
    assert jnp.allclose(loss, ref, rtol=1e-4, atol=1e-6), (loss, ref)

    print("KERNEL_OK")
</pallas_src>

<mosaic_0001>
module attributes {stable_mosaic.version = 11 : i64} {
  func.func @_bub_kernel(%arg0: i32, %arg1: i32, %arg2: memref<1x4x256xf32, #tpu.memory_space<vmem>>, %arg3: memref<1x1x256xi32, #tpu.memory_space<vmem>>, %arg4: memref<1x4x1xf32, #tpu.memory_space<vmem>>, %arg5: memref<4x128xf32, #tpu.memory_space<vmem>>, %arg6: memref<4x128xf32, #tpu.memory_space<vmem>>, %arg7: memref<4x128xf32, #tpu.memory_space<vmem>>, %arg8: memref<1x128xf32, #tpu.memory_space<vmem>>) attributes {dimension_semantics = [#tpu.dimension_semantics<parallel>, #tpu.dimension_semantics<arbitrary>], iteration_bounds = array<i64: 2, 1>, scalar_prefetch = 0 : i64, scratch_operands = 4 : i64, tpu.core_type = #tpu.core_type<tc>, window_params = [{transform_indices = @transform_0, window_bounds = array<i64: 1, 4, 256>}, {transform_indices = @transform_1, window_bounds = array<i64: 1, 1, 256>}, {transform_indices = @transform_2, window_bounds = array<i64: 1, 4, 1>}]} {
    %c0_i32 = arith.constant 0 : i32
    %0 = arith.cmpi eq, %arg1, %c0_i32 : i32
    %1 = arith.extui %0 : i1 to i32
    %c0_i32_0 = arith.constant 0 : i32
    %2 = arith.cmpi ne, %1, %c0_i32_0 : i32
    scf.if %2 {
      %cst_26 = arith.constant 0.000000e+00 : f32
      %60 = vector.broadcast %cst_26 : f32 to vector<4x128xf32>
      %c0_27 = arith.constant 0 : index
      %c0_28 = arith.constant 0 : index
      %61 = vector.load %arg5[%c0_27, %c0_28] : memref<4x128xf32, #tpu.memory_space<vmem>>, vector<4x128xf32>
      tpu.vector_store %arg5[%c0_27, %c0_28], %60 {strides = array<i32>} : memref<4x128xf32, #tpu.memory_space<vmem>>, vector<4x128xf32>,
      %cst_29 = arith.constant 0.000000e+00 : f32
      %62 = vector.broadcast %cst_29 : f32 to vector<4x128xf32>
      %c0_30 = arith.constant 0 : index
      %c0_31 = arith.constant 0 : index
      %63 = vector.load %arg6[%c0_30, %c0_31] : memref<4x128xf32, #tpu.memory_space<vmem>>, vector<4x128xf32>
      tpu.vector_store %arg6[%c0_30, %c0_31], %62 {strides = array<i32>} : memref<4x128xf32, #tpu.memory_space<vmem>>, vector<4x128xf32>,
      %cst_32 = arith.constant 0.000000e+00 : f32
      %64 = vector.broadcast %cst_32 : f32 to vector<4x128xf32>
      %c0_33 = arith.constant 0 : index
      %c0_34 = arith.constant 0 : index
      %65 = vector.load %arg7[%c0_33, %c0_34] : memref<4x128xf32, #tpu.memory_space<vmem>>, vector<4x128xf32>
      tpu.vector_store %arg7[%c0_33, %c0_34], %64 {strides = array<i32>} : memref<4x128xf32, #tpu.memory_space<vmem>>, vector<4x128xf32>,
      %cst_35 = arith.constant 0.000000e+00 : f32
      %66 = vector.broadcast %cst_35 : f32 to vector<1x128xf32>
      %c0_36 = arith.constant 0 : index
      %c0_37 = arith.constant 0 : index
      %67 = vector.load %arg8[%c0_36, %c0_37] : memref<1x128xf32, #tpu.memory_space<vmem>>, vector<1x128xf32>
      tpu.vector_store %arg8[%c0_36, %c0_37], %66 {strides = array<i32>} : memref<1x128xf32, #tpu.memory_space<vmem>>, vector<1x128xf32>,
    } else {
    }
    %c0 = arith.constant 0 : index
    %c0_1 = arith.constant 0 : index
    %c0_2 = arith.constant 0 : index
    %3 = vector.load %arg2[%c0, %c0_1, %c0_2] : memref<1x4x256xf32, #tpu.memory_space<vmem>>, vector<1x4x256xf32>
    %4 = vector.shape_cast %3 : vector<1x4x256xf32> to vector<4x256xf32>
    %c0_3 = arith.constant 0 : index
    %c0_4 = arith.constant 0 : index
    %c0_5 = arith.constant 0 : index
    %5 = vector.load %arg3[%c0_3, %c0_4, %c0_5] : memref<1x1x256xi32, #tpu.memory_space<vmem>>, vector<1x1x256xi32>
    %6 = vector.shape_cast %5 : vector<1x1x256xi32> to vector<1x256xi32>
    %cst = arith.constant dense<0xFF800000> : vector<256xf32>
    %7 = vector.multi_reduction <maximumf>, %4, %cst [0] : vector<4x256xf32> to vector<256xf32>
    %8 = vector.shape_cast %7 : vector<256xf32> to vector<1x256xf32>
    %9 = vector.broadcast %8 : vector<1x256xf32> to vector<4x256xf32>
    %10 = arith.subf %4, %9 : vector<4x256xf32>
    %11 = math.exp %10 : vector<4x256xf32>
    %cst_6 = arith.constant dense<0.000000e+00> : vector<256xf32>
    %12 = vector.multi_reduction <add>, %11, %cst_6 [0] : vector<4x256xf32> to vector<256xf32>
    %13 = vector.shape_cast %12 : vector<256xf32> to vector<1x256xf32>
    %c255_i32 = arith.constant 255 : i32
    %14 = vector.broadcast %c255_i32 : i32 to vector<1x256xi32>
    %15 = arith.cmpi ne, %6, %14 : vector<1x256xi32>
    %16 = arith.extui %15 : vector<1x256xi1> to vector<1x256xi32>
    %17 = arith.sitofp %16 : vector<1x256xi32> to vector<1x256xf32>
    %18 = arith.divf %17, %13 : vector<1x256xf32>
    %19 = vector.broadcast %18 : vector<1x256xf32> to vector<4x256xf32>
    %20 = arith.mulf %11, %19 : vector<4x256xf32>
    %c0_i32_7 = arith.constant 0 : i32
    %c3_i32 = arith.constant 3 : i32
    %21 = vector.broadcast %c0_i32_7 : i32 to vector<1x256xi32>
    %22 = arith.maxsi %21, %6 : vector<1x256xi32>
    %23 = vector.broadcast %c3_i32 : i32 to vector<1x256xi32>
    %24 = arith.minsi %23, %22 : vector<1x256xi32>
    %c-1_i32 = arith.constant -1 : i32
    %25 = vector.broadcast %c-1_i32 : i32 to vector<1x256xi32>
    %26 = arith.select %15, %24, %25 : vector<1x256xi1>, vector<1x256xi32>
    %27 = tpu.iota {dimensions = array<i32: 0>} : vector<4x256xi32>
    %28 = vector.broadcast %26 : vector<1x256xi32> to vector<4x256xi32>
    %29 = arith.cmpi eq, %27, %28 : vector<4x256xi32>
    %30 = arith.extui %29 : vector<4x256xi1> to vector<4x256xi32>
    %31 = arith.sitofp %30 : vector<4x256xi32> to vector<4x256xf32>
    %32 = arith.mulf %20, %31 : vector<4x256xf32>
    %c0_8 = arith.constant 0 : index
    %c0_9 = arith.constant 0 : index
    %33 = vector.load %arg5[%c0_8, %c0_9] : memref<4x128xf32, #tpu.memory_space<vmem>>, vector<4x128xf32>
    %34 = vector.extract_strided_slice %32 {offsets = [0, 0], sizes = [4, 128], strides = [1, 1]} : vector<4x256xf32> to vector<4x128xf32>
    %35 = vector.extract_strided_slice %32 {offsets = [0, 128], sizes = [4, 128], strides = [1, 1]} : vector<4x256xf32> to vector<4x128xf32>
    %36 = arith.addf %34, %35 : vector<4x128xf32>
    %37 = arith.addf %33, %36 : vector<4x128xf32>
    %c0_10 = arith.constant 0 : index
    %c0_11 = arith.constant 0 : index
    %38 = vector.load %arg5[%c0_10, %c0_11] : memref<4x128xf32, #tpu.memory_space<vmem>>, vector<4x128xf32>
    tpu.vector_store %arg5[%c0_10, %c0_11], %37 {strides = array<i32>} : memref<4x128xf32, #tpu.memory_space<vmem>>, vector<4x128xf32>,
    %c0_12 = arith.constant 0 : index
    %c0_13 = arith.constant 0 : index
    %39 = vector.load %arg6[%c0_12, %c0_13] : memref<4x128xf32, #tpu.memory_space<vmem>>, vector<4x128xf32>
    %40 = vector.extract_strided_slice %20 {offsets = [0, 0], sizes = [4, 128], strides = [1, 1]} : vector<4x256xf32> to vector<4x128xf32>
    %41 = vector.extract_strided_slice %20 {offsets = [0, 128], sizes = [4, 128], strides = [1, 1]} : vector<4x256xf32> to vector<4x128xf32>
    %42 = arith.addf %40, %41 : vector<4x128xf32>
    %43 = arith.addf %39, %42 : vector<4x128xf32>
    %c0_14 = arith.constant 0 : index
    %c0_15 = arith.constant 0 : index
    %44 = vector.load %arg6[%c0_14, %c0_15] : memref<4x128xf32, #tpu.memory_space<vmem>>, vector<4x128xf32>
    tpu.vector_store %arg6[%c0_14, %c0_15], %43 {strides = array<i32>} : memref<4x128xf32, #tpu.memory_space<vmem>>, vector<4x128xf32>,
    %c0_16 = arith.constant 0 : index
    %c0_17 = arith.constant 0 : index
    %45 = vector.load %arg7[%c0_16, %c0_17] : memref<4x128xf32, #tpu.memory_space<vmem>>, vector<4x128xf32>
    %46 = vector.extract_strided_slice %31 {offsets = [0, 0], sizes = [4, 128], strides = [1, 1]} : vector<4x256xf32> to vector<4x128xf32>
    %47 = vector.extract_strided_slice %31 {offsets = [0, 128], sizes = [4, 128], strides = [1, 1]} : vector<4x256xf32> to vector<4x128xf32>
    %48 = arith.addf %46, %47 : vector<4x128xf32>
    %49 = arith.addf %45, %48 : vector<4x128xf32>
    %c0_18 = arith.constant 0 : index
    %c0_19 = arith.constant 0 : index
    %50 = vector.load %arg7[%c0_18, %c0_19] : memref<4x128xf32, #tpu.memory_space<vmem>>, vector<4x128xf32>
    tpu.vector_store %arg7[%c0_18, %c0_19], %49 {strides = array<i32>} : memref<4x128xf32, #tpu.memory_space<vmem>>, vector<4x128xf32>,
    %c0_20 = arith.constant 0 : index
    %c0_21 = arith.constant 0 : index
    %51 = vector.load %arg8[%c0_20, %c0_21] : memref<1x128xf32, #tpu.memory_space<vmem>>, vector<1x128xf32>
    %52 = vector.extract_strided_slice %17 {offsets = [0, 0], sizes = [1, 128], strides = [1, 1]} : vector<1x256xf32> to vector<1x128xf32>
    %53 = vector.extract_strided_slice %17 {offsets = [0, 128], sizes = [1, 128], strides = [1, 1]} : vector<1x256xf32> to vector<1x128xf32>
    %54 = arith.addf %52, %53 : vector<1x128xf32>
    %55 = arith.addf %51, %54 : vector<1x128xf32>
    %c0_22 = arith.constant 0 : index
    %c0_23 = arith.constant 0 : index
    %56 = vector.load %arg8[%c0_22, %c0_23] : memref<1x128xf32, #tpu.memory_space<vmem>>, vector<1x128xf32>
    tpu.vector_store %arg8[%c0_22, %c0_23], %55 {strides = array<i32>} : memref<1x128xf32, #tpu.memory_space<vmem>>, vector<1x128xf32>,
    %c0_i32_24 = arith.constant 0 : i32
    %57 = arith.cmpi eq, %arg1, %c0_i32_24 : i32
    %58 = arith.extui %57 : i1 to i32
    %c0_i32_25 = arith.constant 0 : i32
    %59 = arith.cmpi ne, %58, %c0_i32_25 : i32
    scf.if %59 {
      %c0_26 = arith.constant 0 : index
      %c0_27 = arith.constant 0 : index
      %60 = vector.load %arg5[%c0_26, %c0_27] : memref<4x128xf32, #tpu.memory_space<vmem>>, vector<4x128xf32>
      %cst_28 = arith.constant dense<0.000000e+00> : vector<4xf32>
      %61 = vector.multi_reduction <add>, %60, %cst_28 [1] : vector<4x128xf32> to vector<4xf32>
      %62 = vector.shape_cast %61 : vector<4xf32> to vector<4x1xf32>
      %c0_29 = arith.constant 0 : index
      %c0_30 = arith.constant 0 : index
      %63 = vector.load %arg6[%c0_29, %c0_30] : memref<4x128xf32, #tpu.memory_space<vmem>>, vector<4x128xf32>
      %cst_31 = arith.constant dense<0.000000e+00> : vector<4xf32>
      %64 = vector.multi_reduction <add>, %63, %cst_31 [1] : vector<4x128xf32> to vector<4xf32>
      %65 = vector.shape_cast %64 : vector<4xf32> to vector<4x1xf32>
      %c0_32 = arith.constant 0 : index
      %c0_33 = arith.constant 0 : index
      %66 = vector.load %arg7[%c0_32, %c0_33] : memref<4x128xf32, #tpu.memory_space<vmem>>, vector<4x128xf32>
      %cst_34 = arith.constant dense<0.000000e+00> : vector<4xf32>
      %67 = vector.multi_reduction <add>, %66, %cst_34 [1] : vector<4x128xf32> to vector<4xf32>
      %68 = vector.shape_cast %67 : vector<4xf32> to vector<4x1xf32>
      %c0_35 = arith.constant 0 : index
      %c0_36 = arith.constant 0 : index
      %69 = vector.load %arg8[%c0_35, %c0_36] : memref<1x128xf32, #tpu.memory_space<vmem>>, vector<1x128xf32>
      %70 = vector.shape_cast %69 : vector<1x128xf32> to vector<1x1x128xf32>
      %cst_37 = arith.constant dense<0.000000e+00> : vector<1xf32>
      %71 = vector.multi_reduction <add>, %70, %cst_37 [1, 2] : vector<1x1x128xf32> to vector<1xf32>
      %72 = vector.shape_cast %71 : vector<1xf32> to vector<1x1x1xf32>
      %73 = vector.extract %72[0, 0, 0] : f32 from vector<1x1x1xf32>
      %cst_38 = arith.constant 1.000000e-10 : f32
      %74 = vector.broadcast %cst_38 : f32 to vector<4x1xf32>
      %75 = arith.addf %62, %74 : vector<4x1xf32>
      %76 = arith.subf %65, %62 : vector<4x1xf32>
      %77 = arith.subf %68, %62 : vector<4x1xf32>
      %78 = vector.broadcast %73 : f32 to vector<4x1xf32>
      %79 = arith.subf %78, %65 : vector<4x1xf32>
      %80 = arith.subf %79, %68 : vector<4x1xf32>
      %81 = arith.addf %80, %62 : vector<4x1xf32>
      %cst_39 = arith.constant 1.000000e-10 : f32
      %82 = vector.broadcast %cst_39 : f32 to vector<4x1xf32>
      %83 = arith.addf %81, %82 : vector<4x1xf32>
      %84 = arith.mulf %75, %83 : vector<4x1xf32>
      %85 = math.sqrt %84 : vector<4x1xf32>
      %86 = arith.addf %75, %85 : vector<4x1xf32>
      %87 = arith.addf %75, %76 : vector<4x1xf32>
      %88 = arith.addf %87, %77 : vector<4x1xf32>
      %89 = arith.addf %88, %85 : vector<4x1xf32>
      %90 = arith.divf %86, %89 : vector<4x1xf32>
      %cst_40 = arith.constant 1.33333337 : f32
      %91 = vector.broadcast %cst_40 : f32 to vector<4x1xf32>
      %92 = math.powf %90, %91 : vector<4x1xf32>
      %cst_41 = arith.constant 1.000000e+00 : f32
      %93 = vector.broadcast %cst_41 : f32 to vector<4x1xf32>
      %94 = arith.subf %93, %90 : vector<4x1xf32>
      %cst_42 = arith.constant 1.33333337 : f32
      %95 = vector.broadcast %cst_42 : f32 to vector<4x1xf32>
      %96 = math.powf %94, %95 : vector<4x1xf32>
      %97 = arith.addf %92, %96 : vector<4x1xf32>
      %cst_43 = arith.constant 7.500000e-01 : f32
      %98 = vector.broadcast %cst_43 : f32 to vector<4x1xf32>
      %99 = math.powf %97, %98 : vector<4x1xf32>
      %100 = arith.divf %92, %99 : vector<4x1xf32>
      %c0_44 = arith.constant 0 : index
      %c0_45 = arith.constant 0 : index
      %c0_46 = arith.constant 0 : index
      %101 = vector.load %arg4[%c0_44, %c0_45, %c0_46] : memref<1x4x1xf32, #tpu.memory_space<vmem>>, vector<1x4x1xf32>
      %102 = vector.shape_cast %101 : vector<1x4x1xf32> to vector<4x1xf32>
      %103 = vector.shape_cast %100 : vector<4x1xf32> to vector<1x4x1xf32>
      tpu.vector_store %arg4[%c0_44, %c0_45, %c0_46], %103 {strides = array<i32>} : memref<1x4x1xf32, #tpu.memory_space<vmem>>, vector<1x4x1xf32>,
    } else {
    }
    return
  }
  func.func @transform_0(%arg0: i32, %arg1: i32) -> (i32, i32, i32) {
    %c0_i32 = arith.constant 0 : i32
    %c0_i32_0 = arith.constant 0 : i32
    return %arg0, %c0_i32, %arg1 : i32, i32, i32
  }
  func.func @transform_1(%arg0: i32, %arg1: i32) -> (i32, i32, i32) {
    %c0_i32 = arith.constant 0 : i32
    %c0_i32_0 = arith.constant 0 : i32
    return %arg0, %c0_i32, %arg1 : i32, i32, i32
  }
  func.func @transform_2(%arg0: i32, %arg1: i32) -> (i32, i32, i32) {
    %c0_i32 = arith.constant 0 : i32
    %c0_i32_0 = arith.constant 0 : i32
    %c0_i32_1 = arith.constant 0 : i32
    return %arg0, %c0_i32, %c0_i32_0 : i32, i32, i32
  }
}

</mosaic_0001>

<llo_original>
// kernel: tpu_custom_call.1
$region0: #{tpu_custom_call.1}
  #allocation0 [shape = 'u32[]', space=smem, size = 0x4, offset = 0x4, fixed_abs, tag = 'smem constant byte address 0x4 - core index']
  #allocation1 [shape = 'u32[144,128]{1,0:T(1,128)}', space=vmem, size = 0x12000, scoped, tag = 'internal scratch']
  #allocation2 [shape = 'f32[4,128]{1,0:T(4,128)}', space=vmem, size = 0x800, scoped, tag = 'scratch operand']
  #allocation3 [shape = 'f32[4,128]{1,0:T(4,128)}', space=vmem, size = 0x800, scoped, tag = 'scratch operand']
  #allocation4 [shape = 'f32[4,128]{1,0:T(4,128)}', space=vmem, size = 0x800, scoped, tag = 'scratch operand']
  #allocation5 [shape = 'f32[1,128]{1,0:T(1,128)}', space=vmem, size = 0x200, scoped, tag = 'scratch operand']
  %s0 = inlined_call_operand.hbm [shape: f32[2,4,256], index: 0, kind: input, shape index: {}]
  %s1 = inlined_call_operand.hbm [shape: s32[2,1,256], index: 1, kind: input, shape index: {}]
  %s2 = inlined_call_operand.vmem [shape: f32[2,4,1], index: 2, kind: output, shape index: {}]
  %s3 = sld [smem:[#allocation0]]
  $region57: #{tpu_custom_call.1} parent=0
    _
  %s5 = ssub.s32 1, %s3
  %s6 = scalar_select 0, %s5, %s3
  $region1: #{tpu_custom_call.1} parent=0
    #allocation6 [shape = 'u8[8192]{0}', space=vmem, size = 0x2000, scoped, tag = 'input window, operand 0']
    #allocation7 [shape = 's32[2]{0}', space=sflag, size = 0x8, scoped, tag = 'scoped memory for tpu_custom_call.1']
    #allocation8 [shape = 'u8[2048]{0}', space=vmem, size = 0x800, scoped, tag = 'input window, operand 1']
    #allocation9 [shape = 's32[2]{0}', space=sflag, size = 0x8, scoped, tag = 'scoped memory for tpu_custom_call.1']
    %7 = vsyncpa [#allocation7], 0
    %s8 = scalar_lea.sflag [#allocation7], 1
    %9 = vsyncpa %s8, 0
    %10 = vsyncpa [#allocation9], 0
    %s11 = scalar_lea.sflag [#allocation9], 1
    %12 = vsyncpa %s11, 0
    loop: start=0, step=1, limit=4
    $region2: #{tpu_custom_call.1} parent=1 // loop_pre_header
      _
    $region3: #{tpu_custom_call.1} parent=1 // loop_header
      %s14 = sphi 0, %s18
      %p15 = scmp.ge.s32.totalorder %s14, 4
      %s21 = sphi 0, %s33
      %s22 = sphi 0, %s29
      %s23 = sphi 0, %s21
      %s24 = sphi 0, %s22
      %s25 = sphi 0, %s23
      %s26 = sphi 0, %s24
      %s38 = sphi 0, %s40
      %s41 = sphi 0, %s38
      %s42 = sphi 0, %s41
      %s58 = sphi 0, %s42
      %s66 = sphi 0, %s68
      %s69 = sphi 0, %s66
      %s70 = sphi 0, %s69
      %s86 = sphi 0, %s70
      %s92 = sphi 0, %s94
      %s95 = sphi 0, %s92
      %s96 = sphi 0, %s95
      %s112 = sphi 0, %s96
    $region4: #{tpu_custom_call.1} parent=1 // loop_header_branch
      %17 = sbr.rel (%p15) target = $region8
    $region5: #{tpu_custom_call.1} parent=1 // loop_body
      %s19 = ssub.s32 %s14, 1
      %s20 = ssub.s32 %s14, 2
      %s27 = sadd.s32 1, %s22
      %p28 = scmp.ge.s32.totalorder %s27, 1
      %s29 = scalar_select %p28, 0, %s27
      %s30 = sadd.s32 1, %s21
      %s31 = scalar_select %p28, %s30, %s21
      %p32 = scmp.ge.s32.totalorder %s31, 2
      %s33 = scalar_select %p32, 0, %s31
      %s34 = ssub.s32 %s21, %s33
      %s35 = ssub.s32 %s22, %s29
      %s36 = sor.u32 %s34, %s35
      %p37 = scmp.eq.s32.totalorder %s36, 0
      %s39 = sadd.s32 %s38, 1
      %s40 = scalar_select %p37, %s38, %s39
      %p43 = pneg %p37
      %p44 = scmp.eq.s32.totalorder %s14, 1
      %p45 = por %p43, %p44
      %p46 = scmp.ne.s32.totalorder %s38, %s41
      %p47 = scmp.eq.s32.totalorder %s14, 0
      %p48 = por %p46, %p47
      %p49 = scmp.ne.s32.totalorder %s38, %s41
      %p50 = scmp.eq.s32.totalorder %s19, 1
      %p51 = por %p49, %p50
      %p52 = scmp.ne.s32.totalorder %s41, %s42
      %p53 = scmp.eq.s32.totalorder %s19, 0
      %p54 = por %p52, %p53
      %p55 = scmp.ne.s32.totalorder %s41, %s42
      %p56 = scmp.eq.s32.totalorder %s20, 1
      %p57 = por %p55, %p56
      %p59 = scmp.ne.s32.totalorder %s42, %s58
      %p60 = scmp.eq.s32.totalorder %s20, 0
      %p61 = por %p59, %p60
      %s62 = ssub.s32 %s21, %s33
      %s63 = ssub.s32 %s22, %s29
      %s64 = sor.u32 %s62, %s63
      %p65 = scmp.eq.s32.totalorder %s64, 0
      %s67 = sadd.s32 %s66, 1
      %s68 = scalar_select %p65, %s66, %s67
      %p71 = pneg %p65
      %p72 = scmp.eq.s32.totalorder %s14, 1
      %p73 = por %p71, %p72
      %p74 = scmp.ne.s32.totalorder %s66, %s69
      %p75 = scmp.eq.s32.totalorder %s14, 0
      %p76 = por %p74, %p75
      %p77 = scmp.ne.s32.totalorder %s66, %s69
      %p78 = scmp.eq.s32.totalorder %s19, 1
      %p79 = por %p77, %p78
      %p80 = scmp.ne.s32.totalorder %s69, %s70
      %p81 = scmp.eq.s32.totalorder %s19, 0
      %p82 = por %p80, %p81
      %p83 = scmp.ne.s32.totalorder %s69, %s70
      %p84 = scmp.eq.s32.totalorder %s20, 1
      %p85 = por %p83, %p84
      %p87 = scmp.ne.s32.totalorder %s70, %s86
      %p88 = scmp.eq.s32.totalorder %s20, 0
      %p89 = por %p87, %p88
      %s90 = ssub.s32 %s21, %s33
      %p91 = scmp.eq.s32.totalorder %s90, 0
      %s93 = sadd.s32 %s92, 1
      %s94 = scalar_select %p91, %s92, %s93
      %p97 = pneg %p91
      %p98 = scmp.eq.s32.totalorder %s14, 1
      %p99 = por %p97, %p98
      %p100 = scmp.ne.s32.totalorder %s92, %s95
      %p101 = scmp.eq.s32.totalorder %s14, 0
      %p102 = por %p100, %p101
      %p103 = scmp.ne.s32.totalorder %s92, %s95
      %p104 = scmp.eq.s32.totalorder %s19, 1
      %p105 = por %p103, %p104
      %p106 = scmp.ne.s32.totalorder %s95, %s96
      %p107 = scmp.eq.s32.totalorder %s19, 0
      %p108 = por %p106, %p107
      %p109 = scmp.ne.s32.totalorder %s95, %s96
      %p110 = scmp.eq.s32.totalorder %s20, 1
      %p111 = por %p109, %p110
      %p113 = scmp.ne.s32.totalorder %s96, %s112
      %p114 = scmp.eq.s32.totalorder %s20, 0
      %p115 = por %p113, %p114
      %p116 = scmp.le.s32.totalorder 1, %s14
      %p117 = scmp.lt.s32.totalorder %s14, 3
      %p118 = pnand %p116, %p117
      %p119 = pneg %p118
      // Predicated region
      $region9: #{tpu_custom_call.1} parent=5 // pred_check
        _
      $region10: #{tpu_custom_call.1} parent=5 // pred_check_branch
        %121 = sbr.rel (%p118) target = $region12
      $region11: #{tpu_custom_call.1} parent=5 // pred_region
        %s122 = ssub.s32 %s14, 1
      $region12: #{tpu_custom_call.1} parent=5 // pred_fallthru
        _
      %p123 = scmp.lt.s32.totalorder %s14, 2
      // Predicated region
      $region13: #{tpu_custom_call.1} parent=5 // pred_check
        %p124 = pneg %p123
      $region14: #{tpu_custom_call.1} parent=5 // pred_check_branch
        %126 = sbr.rel (%p124) target = $region16
      $region15: #{tpu_custom_call.1} parent=5 // pred_region
        // Predicated region
        $region17: #{tpu_custom_call.1} parent=15 // pred_check
          %p127 = pneg %p48
        $region18: #{tpu_custom_call.1} parent=15 // pred_check_branch
          %129 = sbr.rel (%p127) target = $region20
        $region19: #{tpu_custom_call.1} parent=15 // pred_region
          %s130 = sand.u32 %s38, 1
          %s131 = scalar_lea.sflag [#allocation7], %s130
          %s132 = sand.u32 %s38, 1
          %s133 = smul.addr %s132, 8
          %s134 = scalar_lea.vmem [#allocation6], %s133
          %s135 = smul.u32 2, %s22
          %s137 = ssub.s32 128, 128
          %138 = vsyncadd %s131, %s137
          %s139 = smul.addr %s21, 2
          %s140 = sadd.s32 %s135, %s139
          %s141 = smul.addr %s140, 64
          %s142 = scalar_lea.hbm %s0, %s141
          %s144 = sshll.u32 %s134, 4
          %s145 = int_to_ptr.vmem [resolvable:$true] %s144
          %147 = dma.hbm_to_vmem [thread:$0]  %s142, 128, %s145, %s131
        $region20: #{tpu_custom_call.1} parent=15 // pred_fallthru
          _
        // Predicated region
        $region21: #{tpu_custom_call.1} parent=15 // pred_check
          %p148 = pneg %p76
        $region22: #{tpu_custom_call.1} parent=15 // pred_check_branch
          %150 = sbr.rel (%p148) target = $region24
        $region23: #{tpu_custom_call.1} parent=15 // pred_region
          %s151 = sand.u32 %s66, 1
          %s152 = scalar_lea.sflag [#allocation9], %s151
          %s153 = sand.u32 %s66, 1
          %s154 = smul.addr %s153, 2
          %s155 = scalar_lea.vmem [#allocation8], %s154
          %s156 = smul.u32 2, %s22
          %s158 = ssub.s32 32, 32
          %159 = vsyncadd %s152, %s158
          %s160 = smul.addr %s21, 2
          %s161 = sadd.s32 %s156, %s160
          %s162 = smul.addr %s161, 16
          %s163 = scalar_lea.hbm %s1, %s162
          %s165 = sshll.u32 %s155, 4
          %s166 = int_to_ptr.vmem [resolvable:$true] %s165
          %168 = dma.hbm_to_vmem [thread:$0]  %s163, 32, %s166, %s152
        $region24: #{tpu_custom_call.1} parent=15 // pred_fallthru
          _
      $region16: #{tpu_custom_call.1} parent=5 // pred_fallthru
        _
      %p169 = scmp.le.s32.totalorder 1, %s14
      %p170 = scmp.lt.s32.totalorder %s14, 3
      %p171 = pnand %p169, %p170
      %p172 = pneg %p171
      // Predicated region
      $region25: #{tpu_custom_call.1} parent=5 // pred_check
        _
      $region26: #{tpu_custom_call.1} parent=5 // pred_check_branch
        %174 = sbr.rel (%p171) target = $region28
      $region27: #{tpu_custom_call.1} parent=5 // pred_region
        %s175 = ssub.s32 %s14, 1
        %s176 = sand.u32 %s41, 1
        %s177 = scalar_lea.sflag [#allocation7], %s176
        %s178 = sand.u32 %s41, 1
        %s179 = smul.addr %s178, 8
        %s180 = scalar_lea.vmem [#allocation6], %s179
        // Predicated region
        $region29: #{tpu_custom_call.1} parent=27 // pred_check
          %p181 = pneg %p54
        $region30: #{tpu_custom_call.1} parent=27 // pred_check_branch
          %183 = sbr.rel (%p181) target = $region32
        $region31: #{tpu_custom_call.1} parent=27 // pred_region
          %184 = dma.done %s177, 128
        $region32: #{tpu_custom_call.1} parent=27 // pred_fallthru
          _
        %s185 = sand.u32 %s69, 1
        %s186 = scalar_lea.sflag [#allocation9], %s185
        %s187 = sand.u32 %s69, 1
        %s188 = smul.addr %s187, 2
        %s189 = scalar_lea.vmem [#allocation8], %s188
        // Predicated region
        $region33: #{tpu_custom_call.1} parent=27 // pred_check
          %p190 = pneg %p82
        $region34: #{tpu_custom_call.1} parent=27 // pred_check_branch
          %192 = sbr.rel (%p190) target = $region36
        $region35: #{tpu_custom_call.1} parent=27 // pred_region
          %193 = dma.done %s186, 32
        $region36: #{tpu_custom_call.1} parent=27 // pred_fallthru
          _
        %s194 = sand.u32 %s41, 1
        %s195 = scalar_lea.sflag [#allocation7], %s194
        %s196 = sand.u32 %s41, 1
        %s197 = smul.addr %s196, 8
        %s198 = scalar_lea.vmem [#allocation6], %s197
        %p199 = pneg %p54
        %p200 = pneg %p51
        %s201 = sand.u32 %s69, 1
        %s202 = scalar_lea.sflag [#allocation9], %s201
        %s203 = sand.u32 %s69, 1
        %s204 = smul.addr %s203, 2
        %s205 = scalar_lea.vmem [#allocation8], %s204
        %p206 = pneg %p82
        %p207 = pneg %p79
        %p208 = pneg %p108
        %p209 = pneg %p105
        %p210 = scmp.lt.s32.totalorder %s23, 1
        %s211 = scalar_select %p210, %s23, 1
        %s212 = smul.addr %s211, 4
        %s213 = scalar_lea.vmem %s2, %s212
        %s214 = smul.u32 2, %s24
        %s215 = smul.u32 2, %s24
        %p216 = scmp.lt.s32.totalorder %s23, 1
        %s217 = scalar_select %p216, %s23, 1
        %s218 = smul.addr %s217, 4
        %s219 = scalar_lea.vmem %s2, %s218
        %p220 = scmp.eq.s32.totalorder %s24, 0
        // Predicated region
        $region37: #{tpu_custom_call.1} parent=27 // pred_check
          %p221 = pneg %p220
        $region38: #{tpu_custom_call.1} parent=27 // pred_check_branch
          %223 = sbr.rel (%p221) target = $region40
        $region39: #{tpu_custom_call.1} parent=27 // pred_region
          %224 = vst [vmem:[#allocation2] sm:$0xf] 0.0
          %225 = vst [vmem:[#allocation3] sm:$0xf] 0.0
          %226 = vst [vmem:[#allocation4] sm:$0xf] 0.0
          %227 = vst [vmem:[#allocation5] sm:$0x1] 0.0
        $region40: #{tpu_custom_call.1} parent=27 // pred_fallthru
          _
        %v228 = vld [vmem:[%s180] sm:$0xff]
        %v229 = vld [vmem:[%s189] sm:$0x3]
        %v231 = vcombine.high %v228, %v228
        %vm233 = vcmask 1043456
        %v234 = vsel %vm233, %v228, -inf
        %v235 = vrot.slane %v234, 4
        %v236 = vmax.f32 %v234, %v235
        %v237 = vrot.slane %v236, 2
        %v238 = vmax.f32 %v236, %v237
        %v239 = vrot.slane %v238, 1
        %v240 = vmax.f32 %v238, %v239
        %v241 = vsel %vm233, %v231, -inf
        %v242 = vrot.slane %v241, 4
        %v243 = vmax.f32 %v241, %v242
        %v244 = vrot.slane %v243, 2
        %v245 = vmax.f32 %v243, %v244
        %v246 = vrot.slane %v245, 1
        %v247 = vmax.f32 %v245, %v246
        %v250 = vcombine.low %v240, %v247
        %v252 = vsub.f32 %v228, %v250
        %v253 = vmul.f32 %v252, 1.442695
        %v254 = vpow.pop %v253
        %v256 = vcombine.high %v254, %v254
        %v258 = vsel %vm233, %v254, 0.0
        %v259 = vrot.slane %v258, 4
        %v260 = vadd.f32 %v258, %v259
        %v261 = vrot.slane %v260, 2
        %v262 = vadd.f32 %v260, %v261
        %v263 = vrot.slane %v262, 1
        %v264 = vadd.f32 %v262, %v263
        %v265 = vsel %vm233, %v256, 0.0
        %v266 = vrot.slane %v265, 4
        %v267 = vadd.f32 %v265, %v266
        %v268 = vrot.slane %v267, 2
        %v269 = vadd.f32 %v267, %v268
        %v270 = vrot.slane %v269, 1
        %v271 = vadd.f32 %v269, %v270
        %vm272 = vcmp.ne.s32.totalorder %v229, 255
        %v273 = vsel %vm272, 1, 0
        %v274 = vcvt.s32.f32 %v273
        %v277 = vcombine.low %v264, %v271
        %v279 = vunpack.c.l.s4 1966171168
        %v280 = vunpack.c.0.s8 %v279
        %v281 = vlaneseq
        %v282 = vshrl.u32 %v281, 7
        %v283 = vsub.s32 %v280, %v282
        %v284 = vrot.slane %v277, %v283
        %v286 = vunpack.c.l.s4 1966171168
        %v287 = vunpack.c.0.s8 %v286
        %v288 = vlaneseq
        %v289 = vshrl.u32 %v288, 7
        %v290 = vsub.s32 %v287, %v289
        %v291 = vrot.slane %v284, %v290
        %v293 = vrcp.pop %v291
        %v294 = vmul.f32 %v274, %v293
        %v296 = vlaneseq
        %v297 = vshrl.u32 %v296, 7
        %v298 = vsub.s32 0, %v297
        %v299 = vrot.slane %v294, %v298
        %v300 = vlaneseq
        %v301 = vshrl.u32 %v300, 7
        %v302 = vsub.s32 1, %v301
        %v303 = vrot.slane %v294, %v302
        %v304 = vcombine.low %v299, %v303
        %v306 = vmul.f32 %v254, %v304
        %vm307 = vcmp.gt.s32.totalorder %v229, 0
        %v308 = vsel %vm307, %v229, 0
        %vm309 = vcmp.lt.s32.totalorder %v308, 3
        %v310 = vsel %vm309, %v308, 3
        %v311 = vsel %vm272, %v310, 4294967295
        %v312 = vlaneseq
        %v313 = vshrl.u32 %v312, 7
        %v314 = vlaneseq
        %v315 = vshrl.u32 %v314, 7
        %v316 = vsub.s32 0, %v315
        %v317 = vrot.slane %v311, %v316
        %v318 = vlaneseq
        %v319 = vshrl.u32 %v318, 7
        %v320 = vsub.s32 1, %v319
        %v321 = vrot.slane %v311, %v320
        %vm322 = vcmp.eq.s32.totalorder %v313, %v317
        %vm323 = vcmp.eq.s32.totalorder %v313, %v321
        %v324 = vsel %vm322, 1, 0
        %v325 = vsel %vm323, 1, 0
        %v326 = vcvt.s32.f32 %v324
        %v327 = vcvt.s32.f32 %v325
        %v330 = vcombine.low %v326, %v327
        %v332 = vmul.f32 %v306, %v330
        %v333 = vld [vmem:[#allocation2] sm:$0xf]
        %v335 = vrot.slane %v332, 4
        %v337 = vadd.f32 %v332, %v335
        %v338 = vadd.f32 %v333, %v337
        %339 = vst [vmem:[#allocation2] sm:$0xf] %v338
        %v340 = vld [vmem:[#allocation3] sm:$0xf]
        %v342 = vrot.slane %v306, 4
        %v344 = vadd.f32 %v306, %v342
        %v345 = vadd.f32 %v340, %v344
        %346 = vst [vmem:[#allocation3] sm:$0xf] %v345
        %v347 = vld [vmem:[#allocation4] sm:$0xf]
        %v348 = vadd.f32 %v326, %v327
        %v349 = vadd.f32 %v347, %v348
        %350 = vst [vmem:[#allocation4] sm:$0xf] %v349
        %v351 = vld [vmem:[#allocation5] sm:$0x1]
        %v353 = vrot.slane %v274, 1
        %v355 = vadd.f32 %v274, %v353
        %v356 = vadd.f32 %v351, %v355
        %357 = vst [vmem:[#allocation5] sm:$0x1] %v356
        // Predicated region
        $region41: #{tpu_custom_call.1} parent=27 // pred_check
          %p358 = pneg %p220
        $region42: #{tpu_custom_call.1} parent=27 // pred_check_branch
          %360 = sbr.rel (%p358) target = $region44
        $region43: #{tpu_custom_call.1} parent=27 // pred_region
          %v361 = vld [vmem:[#allocation2] sm:$0xf]
          %v362 = vsel %vm233, %v361, 0.0
          %363 = vadd.xlane.f32.xlu0 %v362
          %v364 = vpop.xlane.xlu0 %363
          %v365 = vld [vmem:[#allocation3] sm:$0xf]
          %v366 = vsel %vm233, %v365, 0.0
          %367 = vadd.xlane.f32.xlu0 %v366
          %v368 = vpop.xlane.xlu0 %367
          %v369 = vld [vmem:[#allocation4] sm:$0xf]
          %v370 = vsel %vm233, %v369, 0.0
          %371 = vadd.xlane.f32.xlu0 %v370
          %v372 = vpop.xlane.xlu0 %371
          %v373 = vld [vmem:[#allocation5] sm:$0x1]
          %vm374 = vcmask 1040384
          %v375 = vsel %vm374, %v373, 0.0
          %376 = vadd.xlane.f32.xlu0 %v375
          %v377 = vpop.xlane.xlu0 %376
          %v378 = vrot.slane %v377, 4
          %v379 = vadd.f32 %v377, %v378
          %v380 = vrot.slane %v379, 2
          %v381 = vadd.f32 %v379, %v380
          %v382 = vrot.slane %v381, 1
          %v383 = vadd.f32 %v381, %v382
          %s384 = vtos %v383
          %v385 = vadd.f32 %v364, 1e-10
          %v386 = vsub.f32 %v368, %v364
          %v387 = vsub.f32 %v372, %v364
          %v388 = vstv %s384
          %v389 = vsub.f32 %v388, %v368
          %v390 = vsub.f32 %v389, %v372
          %v391 = vadd.f32 %v390, %v364
          %v392 = vadd.f32 %v391, 1e-10
          %v393 = vmul.f32 %v385, %v392
          %v394 = vrsqrt.pop %v393
          %v395 = vmul.f32 %v393, %v394
          %vm396 = vcmp.eq.f32.partialorder %v393, inf
          %v397 = vsel %vm396, %v393, %v395
          %vm398 = vcmp.eq.f32.partialorder %v393, 0.0
          %v399 = vand.u32 %v393, 2147483648
          %v400 = vsel %vm398, %v399, %v397
          %v401 = vadd.f32 %v385, %v400
          %v402 = vadd.f32 %v385, %v386
          %v403 = vadd.f32 %v402, %v387
          %v404 = vadd.f32 %v403, %v400
          %v405 = vrcp.pop %v404
          %v406 = vmul.f32 %v401, %v405
          %v407 = vpow.f32 %v406, 1.3333334
          %v408 = vsub.f32 1.0, %v406
          %v409 = vpow.f32 %v408, 1.3333334
          %v410 = vadd.f32 %v407, %v409
          %v411 = vpow.f32 %v410, 0.75
          %v412 = vrcp.pop %v411
          %v413 = vmul.f32 %v407, %v412
          %vm414 = vcmask 3072
          %415 = vst.msk [vmem:[%s219] sm:$0xf] %vm414, %v413
        $region44: #{tpu_custom_call.1} parent=27 // pred_fallthru
          _
        %p416 = scmp.lt.s32.totalorder %s23, 1
        %s417 = scalar_select %p416, %s23, 1
        %s418 = smul.addr %s417, 4
        %s419 = scalar_lea.vmem %s2, %s418
        // Predicated region
        $region45: #{tpu_custom_call.1} parent=27 // pred_check
          %p420 = pneg %p105
        $region46: #{tpu_custom_call.1} parent=27 // pred_check_branch
          %422 = sbr.rel (%p420) target = $region48
        $region47: #{tpu_custom_call.1} parent=27 // pred_region
          _
        $region48: #{tpu_custom_call.1} parent=27 // pred_fallthru
          _
      $region28: #{tpu_custom_call.1} parent=5 // pred_fallthru
        _
      %p423 = scmp.le.s32.totalorder 2, %s14
      // Predicated region
      $region49: #{tpu_custom_call.1} parent=5 // pred_check
        %p424 = pneg %p423
      $region50: #{tpu_custom_call.1} parent=5 // pred_check_branch
        %426 = sbr.rel (%p424) target = $region52
      $region51: #{tpu_custom_call.1} parent=5 // pred_region
        %s427 = ssub.s32 %s14, 2
        // Predicated region
        $region53: #{tpu_custom_call.1} parent=51 // pred_check
          %p428 = pneg %p111
        $region54: #{tpu_custom_call.1} parent=51 // pred_check_branch
          %430 = sbr.rel (%p428) target = $region56
        $region55: #{tpu_custom_call.1} parent=51 // pred_region
          %p431 = scmp.lt.s32.totalorder %s25, 1
          %s432 = scalar_select %p431, %s25, 1
          %s433 = smul.addr %s432, 4
          %s434 = scalar_lea.vmem %s2, %s433
        $region56: #{tpu_custom_call.1} parent=51 // pred_fallthru
          _
      $region52: #{tpu_custom_call.1} parent=5 // pred_fallthru
        _
    $region6: #{tpu_custom_call.1} parent=1 // loop_footer
      %s18 = sadd.s32 1, %s14
    $region7: #{tpu_custom_call.1} parent=1 // loop_footer_branch
      %13 = sbr.rel target = $region3
    $region8: #{tpu_custom_call.1} parent=1 // loop_exit
      _
    %435 = vsyncpa [#allocation7], 1
    %s436 = scalar_lea.sflag [#allocation7], 1
    %437 = vsyncpa %s436, 1
    %438 = vsyncpa [#allocation9], 1
    %s439 = scalar_lea.sflag [#allocation9], 1
    %440 = vsyncpa %s439, 1

</llo_original>
